<compile_context>
chip_gen: v7x
topology: tpu7x:2x2x1
jax: 0.10.0
libtpu: 0.0.40
codegen_flags: <defaults>
</compile_context>

<pallas_src>
import functools

import jax
import jax.numpy as jnp
import numpy as np
from jax import lax
from jax.experimental import pallas as pl
from jax.experimental.pallas import tpu as pltpu


def _block_kernel(x_ref, w1_ref, b1_ref, w2_ref, b2_ref, o_ref, *, k, wp_size):
    # x_ref : (2, 2, Hp, L) f32, slab[h%2, w%2, h//2, n*C*Wp + c*Wp + w//2] = x[n,c,h,w]
    # w*_ref: (k*k, L) f32  per-tap weight planes (w[c,i,j] replicated over the
    #         Wp lanes of channel c and over batch n)
    # b*_ref: (1, L)  f32  bias planes
    # o_ref : (Hp, L) f32
    _, _, Hp, L = x_ref.shape
    Wp = wp_size
    pad = (k - 1) // 2

    x = x_ref[...].astype(jnp.float32)

    # --- nn.AvgPool2d(2, 2, 0): window parities are leading dims -> 3 adds + scale.
    pooled = 0.25 * (x[0, 0] + x[0, 1] + x[1, 0] + x[1, 1])          # (Hp, L)

    # --- 'same'-padding border masks, built once and shared by both convs.
    h_idx = lax.broadcasted_iota(jnp.int32, (Hp, L), 0)
    wp_idx = lax.broadcasted_iota(jnp.int32, (Hp, L), 1) % Wp        # per-Wp-segment index
    h_keep = {}
    w_keep = {}
    for i in range(k):
        sh = i - pad
        if sh > 0:
            h_keep[i] = h_idx < Hp - sh
        elif sh < 0:
            h_keep[i] = h_idx >= -sh
    for j in range(k):
        sw = j - pad
        if sw > 0:
            w_keep[j] = wp_idx < Wp - sw
        elif sw < 0:
            w_keep[j] = wp_idx >= -sw

    def dwconv_sigmoid(inp, w_ref, b_ref):
        # Depthwise (groups=C) cross-correlation, 'same' padding, + bias, sigmoid.
        w = w_ref[...]                                               # (k*k, L)
        b = b_ref[...]                                               # (1, L)
        acc = None
        for i in range(k):
            sh = i - pad
            rows = inp
            if sh != 0:
                rows = pltpu.roll(rows, (-sh) % Hp, axis=0)          # sublane roll (XLU)
                rows = jnp.where(h_keep[i], rows, 0.0)
            for j in range(k):
                sw = j - pad
                tap = rows
                if sw != 0:
                    tap = pltpu.roll(tap, (-sw) % L, axis=1)         # lane roll (XLU)
                    tap = jnp.where(w_keep[j], tap, 0.0)             # zero wrapped / padded lanes
                term = tap * w[i * k + j]                            # full-vreg FMA for all N*C
                acc = term if acc is None else acc + term
        z = acc + b
        # sigmoid(z) == 0.5*tanh(0.5*z) + 0.5 : single EUP transcendental.
        return 0.5 * jnp.tanh(0.5 * z) + 0.5

    out = dwconv_sigmoid(pooled, w1_ref, b1_ref)                     # conv  -> sigmoid
    out = dwconv_sigmoid(out, w2_ref, b2_ref)                        # conv2 -> sigmoid
    o_ref[...] = out.astype(o_ref.dtype)


def block_forward(x, w1, b1, w2, b2, *, k):
    N, C, H, W = x.shape
    assert H % 2 == 0 and W % 2 == 0, "AvgPool2d(2,2) requires even H, W"
    assert k % 2 == 1, "'same' padding math assumes odd kernel size"
    Hp, Wp = H // 2, W // 2
    L = N * C * Wp

    xf = x.astype(jnp.float32)
    # Lane-dense packing (layout plumbing only; the averaging happens in-kernel):
    #   slab[h%2, w%2, h//2, n*C*Wp + c*Wp + w//2] = x[n, c, h, w]
    x_slab = (xf.reshape(N, C, Hp, 2, Wp, 2)
                .transpose(3, 5, 2, 0, 1, 4)
                .reshape(2, 2, Hp, L))

    def weight_planes(w):
        # (C, k, k) -> (k*k, L) with plane[t, n*C*Wp + c*Wp + wp] = w[c, i, j], t = i*k+j
        wf = jnp.asarray(w, jnp.float32).reshape(C, k * k)
        planes = jnp.repeat(wf, Wp, axis=0)          # (C*Wp, k*k)
        planes = jnp.tile(planes, (N, 1))            # (L,   k*k)
        return planes.T                              # (k*k, L)

    def bias_plane(b):
        bf = jnp.asarray(b, jnp.float32)
        return jnp.tile(jnp.repeat(bf, Wp), N).reshape(1, L)

    kernel = functools.partial(_block_kernel, k=k, wp_size=Wp)
    out_slab = pl.pallas_call(
        kernel,
        out_shape=jax.ShapeDtypeStruct((Hp, L), jnp.float32),
        in_specs=[pl.BlockSpec(memory_space=pltpu.MemorySpace.VMEM)] * 5,
        out_specs=pl.BlockSpec(memory_space=pltpu.MemorySpace.VMEM),
    )(x_slab, weight_planes(w1), bias_plane(b1), weight_planes(w2), bias_plane(b2))

    # Unpack the lane-dense slab back to NCHW.
    out = out_slab.reshape(Hp, N, C, Wp).transpose(1, 2, 0, 3)       # (N, C, Hp, Wp)
    return out.astype(x.dtype)


def _reference_forward(x, w1, b1, w2, b2, *, k):
    # Pure-JAX reference (same cross-correlation semantics as torch.nn.Conv2d).
    N, C, H, W = x.shape
    Hp, Wp = H // 2, W // 2
    pooled = x.reshape(N, C, Hp, 2, Wp, 2).mean(axis=(3, 5))
    pad = (k - 1) // 2

    def dw(inp, w, b):
        padded = jnp.pad(inp, ((0, 0), (0, 0), (pad, pad), (pad, pad)))
        acc = jnp.broadcast_to(b[None, :, None, None], inp.shape).astype(jnp.float32)
        for i in range(k):
            for j in range(k):
                acc = acc + padded[:, :, i:i + Hp, j:j + Wp] * w[None, :, i, j, None, None]
        return jax.nn.sigmoid(acc)

    return dw(dw(pooled, w1, b1), w2, b2)


if __name__ == "__main__":
    # Block(n=4, k=3) with input (2, 4, 16, 16)
    N, C, H, W, K = 2, 4, 16, 16, 3

    key = jax.random.PRNGKey(0)
    kx, kw1, kb1, kw2, kb2 = jax.random.split(key, 5)

    x = jax.random.normal(kx, (N, C, H, W), dtype=jnp.float32)
    # _weights_init_: Conv2d weights/biases ~ N(0, 1); depthwise weight (C,1,k,k) stored as (C,k,k)
    w1 = jax.random.normal(kw1, (C, K, K), dtype=jnp.float32)
    b1 = jax.random.normal(kb1, (C,), dtype=jnp.float32)
    w2 = jax.random.normal(kw2, (C, K, K), dtype=jnp.float32)
    b2 = jax.random.normal(kb2, (C,), dtype=jnp.float32)

    out = block_forward(x, w1, b1, w2, b2, k=K)
    out = jax.block_until_ready(out)

    ref = _reference_forward(x, w1, b1, w2, b2, k=K)
    if not np.allclose(np.asarray(out), np.asarray(ref), atol=1e-4, rtol=1e-4):
        raise AssertionError("Pallas kernel output does not match reference")

    print("KERNEL_OK")
</pallas_src>

<mosaic_0001>
module attributes {stable_mosaic.version = 11 : i64} {
  func.func @_block_kernel(%arg0: memref<2x2x8x64xf32, #tpu.memory_space<vmem>>, %arg1: memref<9x64xf32, #tpu.memory_space<vmem>>, %arg2: memref<1x64xf32, #tpu.memory_space<vmem>>, %arg3: memref<9x64xf32, #tpu.memory_space<vmem>>, %arg4: memref<1x64xf32, #tpu.memory_space<vmem>>, %arg5: memref<8x64xf32, #tpu.memory_space<vmem>>) attributes {dimension_semantics = [], scalar_prefetch = 0 : i64, scratch_operands = 0 : i64, tpu.core_type = #tpu.core_type<tc>} {
    %c0 = arith.constant 0 : index
    %c0_0 = arith.constant 0 : index
    %c0_1 = arith.constant 0 : index
    %c0_2 = arith.constant 0 : index
    %0 = vector.load %arg0[%c0, %c0_0, %c0_1, %c0_2] : memref<2x2x8x64xf32, #tpu.memory_space<vmem>>, vector<2x2x8x64xf32>
    %1 = vector.extract_strided_slice %0 {offsets = [0, 0, 0, 0], sizes = [1, 1, 8, 64], strides = [1, 1, 1, 1]} : vector<2x2x8x64xf32> to vector<1x1x8x64xf32>
    %2 = vector.shape_cast %1 : vector<1x1x8x64xf32> to vector<8x64xf32>
    %3 = vector.extract_strided_slice %0 {offsets = [0, 1, 0, 0], sizes = [1, 1, 8, 64], strides = [1, 1, 1, 1]} : vector<2x2x8x64xf32> to vector<1x1x8x64xf32>
    %4 = vector.shape_cast %3 : vector<1x1x8x64xf32> to vector<8x64xf32>
    %5 = arith.addf %2, %4 : vector<8x64xf32>
    %6 = vector.extract_strided_slice %0 {offsets = [1, 0, 0, 0], sizes = [1, 1, 8, 64], strides = [1, 1, 1, 1]} : vector<2x2x8x64xf32> to vector<1x1x8x64xf32>
    %7 = vector.shape_cast %6 : vector<1x1x8x64xf32> to vector<8x64xf32>
    %8 = arith.addf %5, %7 : vector<8x64xf32>
    %9 = vector.extract_strided_slice %0 {offsets = [1, 1, 0, 0], sizes = [1, 1, 8, 64], strides = [1, 1, 1, 1]} : vector<2x2x8x64xf32> to vector<1x1x8x64xf32>
    %10 = vector.shape_cast %9 : vector<1x1x8x64xf32> to vector<8x64xf32>
    %11 = arith.addf %8, %10 : vector<8x64xf32>
    %cst = arith.constant 2.500000e-01 : f32
    %12 = vector.broadcast %cst : f32 to vector<8x64xf32>
    %13 = arith.mulf %12, %11 : vector<8x64xf32>
    %14 = tpu.iota {dimensions = array<i32: 0>} : vector<8x64xi32>
    %15 = tpu.iota {dimensions = array<i32: 1>} : vector<8x64xi32>
    %c8_i32 = arith.constant 8 : i32
    %c0_i32 = arith.constant 0 : i32
    %16 = arith.cmpi eq, %c8_i32, %c0_i32 : i32
    %c1_i32 = arith.constant 1 : i32
    %17 = arith.select %16, %c1_i32, %c8_i32 : i32
    %18 = vector.broadcast %17 : i32 to vector<8x64xi32>
    %19 = arith.remsi %15, %18 : vector<8x64xi32>
    %c0_i32_3 = arith.constant 0 : i32
    %20 = vector.broadcast %c0_i32_3 : i32 to vector<8x64xi32>
    %21 = arith.cmpi ne, %19, %20 : vector<8x64xi32>
    %c0_i32_4 = arith.constant 0 : i32
    %22 = vector.broadcast %c0_i32_4 : i32 to vector<8x64xi32>
    %23 = arith.cmpi slt, %19, %22 : vector<8x64xi32>
    %c0_i32_5 = arith.constant 0 : i32
    %24 = arith.cmpi slt, %17, %c0_i32_5 : i32
    %25 = vector.broadcast %24 : i1 to vector<8x64xi1>
    %26 = vector.broadcast %25 : vector<8x64xi1> to vector<8x64xi1>
    %27 = arith.xori %23, %26 : vector<8x64xi1>
    %28 = arith.andi %27, %21 : vector<8x64xi1>
    %29 = vector.broadcast %17 : i32 to vector<8x64xi32>
    %30 = arith.addi %19, %29 : vector<8x64xi32>
    %31 = arith.select %28, %30, %19 : vector<8x64xi1>, vector<8x64xi32>
    %c1_i32_6 = arith.constant 1 : i32
    %32 = vector.broadcast %c1_i32_6 : i32 to vector<8x64xi32>
    %33 = arith.cmpi sge, %14, %32 : vector<8x64xi32>
    %c7_i32 = arith.constant 7 : i32
    %34 = vector.broadcast %c7_i32 : i32 to vector<8x64xi32>
    %35 = arith.cmpi slt, %14, %34 : vector<8x64xi32>
    %c1_i32_7 = arith.constant 1 : i32
    %36 = vector.broadcast %c1_i32_7 : i32 to vector<8x64xi32>
    %37 = arith.cmpi sge, %31, %36 : vector<8x64xi32>
    %c7_i32_8 = arith.constant 7 : i32
    %38 = vector.broadcast %c7_i32_8 : i32 to vector<8x64xi32>
    %39 = arith.cmpi slt, %31, %38 : vector<8x64xi32>
    %c0_9 = arith.constant 0 : index
    %c0_10 = arith.constant 0 : index
    %40 = vector.load %arg1[%c0_9, %c0_10] : memref<9x64xf32, #tpu.memory_space<vmem>>, vector<9x64xf32>
    %c0_11 = arith.constant 0 : index
    %c0_12 = arith.constant 0 : index
    %41 = vector.load %arg2[%c0_11, %c0_12] : memref<1x64xf32, #tpu.memory_space<vmem>>, vector<1x64xf32>
    %c1_i32_13 = arith.constant 1 : i32
    %42 = tpu.dynamic_rotate %13 by %c1_i32_13 dim 0 : vector<8x64xf32>, i32 -> vector<8x64xf32>
    %cst_14 = arith.constant 0.000000e+00 : f32
    %43 = vector.broadcast %cst_14 : f32 to vector<8x64xf32>
    %44 = arith.select %33, %42, %43 : vector<8x64xi1>, vector<8x64xf32>
    %c1_i32_15 = arith.constant 1 : i32
    %45 = tpu.dynamic_rotate %44 by %c1_i32_15 dim 1 : vector<8x64xf32>, i32 -> vector<8x64xf32>
    %cst_16 = arith.constant 0.000000e+00 : f32
    %46 = vector.broadcast %cst_16 : f32 to vector<8x64xf32>
    %47 = arith.select %37, %45, %46 : vector<8x64xi1>, vector<8x64xf32>
    %48 = vector.extract_strided_slice %40 {offsets = [0, 0], sizes = [1, 64], strides = [1, 1]} : vector<9x64xf32> to vector<1x64xf32>
    %49 = vector.shape_cast %48 : vector<1x64xf32> to vector<64xf32>
    %50 = vector.shape_cast %49 : vector<64xf32> to vector<1x64xf32>
    %51 = vector.broadcast %50 : vector<1x64xf32> to vector<8x64xf32>
    %52 = arith.mulf %47, %51 : vector<8x64xf32>
    %53 = vector.extract_strided_slice %40 {offsets = [1, 0], sizes = [1, 64], strides = [1, 1]} : vector<9x64xf32> to vector<1x64xf32>
    %54 = vector.shape_cast %53 : vector<1x64xf32> to vector<64xf32>
    %55 = vector.shape_cast %54 : vector<64xf32> to vector<1x64xf32>
    %56 = vector.broadcast %55 : vector<1x64xf32> to vector<8x64xf32>
    %57 = arith.mulf %44, %56 : vector<8x64xf32>
    %58 = arith.addf %52, %57 : vector<8x64xf32>
    %c63_i32 = arith.constant 63 : i32
    %59 = tpu.dynamic_rotate %44 by %c63_i32 dim 1 : vector<8x64xf32>, i32 -> vector<8x64xf32>
    %cst_17 = arith.constant 0.000000e+00 : f32
    %60 = vector.broadcast %cst_17 : f32 to vector<8x64xf32>
    %61 = arith.select %39, %59, %60 : vector<8x64xi1>, vector<8x64xf32>
    %62 = vector.extract_strided_slice %40 {offsets = [2, 0], sizes = [1, 64], strides = [1, 1]} : vector<9x64xf32> to vector<1x64xf32>
    %63 = vector.shape_cast %62 : vector<1x64xf32> to vector<64xf32>
    %64 = vector.shape_cast %63 : vector<64xf32> to vector<1x64xf32>
    %65 = vector.broadcast %64 : vector<1x64xf32> to vector<8x64xf32>
    %66 = arith.mulf %61, %65 : vector<8x64xf32>
    %67 = arith.addf %58, %66 : vector<8x64xf32>
    %c1_i32_18 = arith.constant 1 : i32
    %68 = tpu.dynamic_rotate %13 by %c1_i32_18 dim 1 : vector<8x64xf32>, i32 -> vector<8x64xf32>
    %cst_19 = arith.constant 0.000000e+00 : f32
    %69 = vector.broadcast %cst_19 : f32 to vector<8x64xf32>
    %70 = arith.select %37, %68, %69 : vector<8x64xi1>, vector<8x64xf32>
    %71 = vector.extract_strided_slice %40 {offsets = [3, 0], sizes = [1, 64], strides = [1, 1]} : vector<9x64xf32> to vector<1x64xf32>
    %72 = vector.shape_cast %71 : vector<1x64xf32> to vector<64xf32>
    %73 = vector.shape_cast %72 : vector<64xf32> to vector<1x64xf32>
    %74 = vector.broadcast %73 : vector<1x64xf32> to vector<8x64xf32>
    %75 = arith.mulf %70, %74 : vector<8x64xf32>
    %76 = arith.addf %67, %75 : vector<8x64xf32>
    %77 = vector.extract_strided_slice %40 {offsets = [4, 0], sizes = [1, 64], strides = [1, 1]} : vector<9x64xf32> to vector<1x64xf32>
    %78 = vector.shape_cast %77 : vector<1x64xf32> to vector<64xf32>
    %79 = vector.shape_cast %78 : vector<64xf32> to vector<1x64xf32>
    %80 = vector.broadcast %79 : vector<1x64xf32> to vector<8x64xf32>
    %81 = arith.mulf %13, %80 : vector<8x64xf32>
    %82 = arith.addf %76, %81 : vector<8x64xf32>
    %c63_i32_20 = arith.constant 63 : i32
    %83 = tpu.dynamic_rotate %13 by %c63_i32_20 dim 1 : vector<8x64xf32>, i32 -> vector<8x64xf32>
    %cst_21 = arith.constant 0.000000e+00 : f32
    %84 = vector.broadcast %cst_21 : f32 to vector<8x64xf32>
    %85 = arith.select %39, %83, %84 : vector<8x64xi1>, vector<8x64xf32>
    %86 = vector.extract_strided_slice %40 {offsets = [5, 0], sizes = [1, 64], strides = [1, 1]} : vector<9x64xf32> to vector<1x64xf32>
    %87 = vector.shape_cast %86 : vector<1x64xf32> to vector<64xf32>
    %88 = vector.shape_cast %87 : vector<64xf32> to vector<1x64xf32>
    %89 = vector.broadcast %88 : vector<1x64xf32> to vector<8x64xf32>
    %90 = arith.mulf %85, %89 : vector<8x64xf32>
    %91 = arith.addf %82, %90 : vector<8x64xf32>
    %c7_i32_22 = arith.constant 7 : i32
    %92 = tpu.dynamic_rotate %13 by %c7_i32_22 dim 0 : vector<8x64xf32>, i32 -> vector<8x64xf32>
    %cst_23 = arith.constant 0.000000e+00 : f32
    %93 = vector.broadcast %cst_23 : f32 to vector<8x64xf32>
    %94 = arith.select %35, %92, %93 : vector<8x64xi1>, vector<8x64xf32>
    %c1_i32_24 = arith.constant 1 : i32
    %95 = tpu.dynamic_rotate %94 by %c1_i32_24 dim 1 : vector<8x64xf32>, i32 -> vector<8x64xf32>
    %cst_25 = arith.constant 0.000000e+00 : f32
    %96 = vector.broadcast %cst_25 : f32 to vector<8x64xf32>
    %97 = arith.select %37, %95, %96 : vector<8x64xi1>, vector<8x64xf32>
    %98 = vector.extract_strided_slice %40 {offsets = [6, 0], sizes = [1, 64], strides = [1, 1]} : vector<9x64xf32> to vector<1x64xf32>
    %99 = vector.shape_cast %98 : vector<1x64xf32> to vector<64xf32>
    %100 = vector.shape_cast %99 : vector<64xf32> to vector<1x64xf32>
    %101 = vector.broadcast %100 : vector<1x64xf32> to vector<8x64xf32>
    %102 = arith.mulf %97, %101 : vector<8x64xf32>
    %103 = arith.addf %91, %102 : vector<8x64xf32>
    %104 = vector.extract_strided_slice %40 {offsets = [7, 0], sizes = [1, 64], strides = [1, 1]} : vector<9x64xf32> to vector<1x64xf32>
    %105 = vector.shape_cast %104 : vector<1x64xf32> to vector<64xf32>
    %106 = vector.shape_cast %105 : vector<64xf32> to vector<1x64xf32>
    %107 = vector.broadcast %106 : vector<1x64xf32> to vector<8x64xf32>
    %108 = arith.mulf %94, %107 : vector<8x64xf32>
    %109 = arith.addf %103, %108 : vector<8x64xf32>
    %c63_i32_26 = arith.constant 63 : i32
    %110 = tpu.dynamic_rotate %94 by %c63_i32_26 dim 1 : vector<8x64xf32>, i32 -> vector<8x64xf32>
    %cst_27 = arith.constant 0.000000e+00 : f32
    %111 = vector.broadcast %cst_27 : f32 to vector<8x64xf32>
    %112 = arith.select %39, %110, %111 : vector<8x64xi1>, vector<8x64xf32>
    %113 = vector.extract_strided_slice %40 {offsets = [8, 0], sizes = [1, 64], strides = [1, 1]} : vector<9x64xf32> to vector<1x64xf32>
    %114 = vector.shape_cast %113 : vector<1x64xf32> to vector<64xf32>
    %115 = vector.shape_cast %114 : vector<64xf32> to vector<1x64xf32>
    %116 = vector.broadcast %115 : vector<1x64xf32> to vector<8x64xf32>
    %117 = arith.mulf %112, %116 : vector<8x64xf32>
    %118 = arith.addf %109, %117 : vector<8x64xf32>
    %119 = vector.broadcast %41 : vector<1x64xf32> to vector<8x64xf32>
    %120 = arith.addf %118, %119 : vector<8x64xf32>
    %cst_28 = arith.constant 5.000000e-01 : f32
    %121 = vector.broadcast %cst_28 : f32 to vector<8x64xf32>
    %122 = arith.mulf %121, %120 : vector<8x64xf32>
    %123 = math.tanh %122 : vector<8x64xf32>
    %cst_29 = arith.constant 5.000000e-01 : f32
    %124 = vector.broadcast %cst_29 : f32 to vector<8x64xf32>
    %125 = arith.mulf %124, %123 : vector<8x64xf32>
    %cst_30 = arith.constant 5.000000e-01 : f32
    %126 = vector.broadcast %cst_30 : f32 to vector<8x64xf32>
    %127 = arith.addf %125, %126 : vector<8x64xf32>
    %c0_31 = arith.constant 0 : index
    %c0_32 = arith.constant 0 : index
    %128 = vector.load %arg3[%c0_31, %c0_32] : memref<9x64xf32, #tpu.memory_space<vmem>>, vector<9x64xf32>
    %c0_33 = arith.constant 0 : index
    %c0_34 = arith.constant 0 : index
    %129 = vector.load %arg4[%c0_33, %c0_34] : memref<1x64xf32, #tpu.memory_space<vmem>>, vector<1x64xf32>
    %c1_i32_35 = arith.constant 1 : i32
    %130 = tpu.dynamic_rotate %127 by %c1_i32_35 dim 0 : vector<8x64xf32>, i32 -> vector<8x64xf32>
    %cst_36 = arith.constant 0.000000e+00 : f32
    %131 = vector.broadcast %cst_36 : f32 to vector<8x64xf32>
    %132 = arith.select %33, %130, %131 : vector<8x64xi1>, vector<8x64xf32>
    %c1_i32_37 = arith.constant 1 : i32
    %133 = tpu.dynamic_rotate %132 by %c1_i32_37 dim 1 : vector<8x64xf32>, i32 -> vector<8x64xf32>
    %cst_38 = arith.constant 0.000000e+00 : f32
    %134 = vector.broadcast %cst_38 : f32 to vector<8x64xf32>
    %135 = arith.select %37, %133, %134 : vector<8x64xi1>, vector<8x64xf32>
    %136 = vector.extract_strided_slice %128 {offsets = [0, 0], sizes = [1, 64], strides = [1, 1]} : vector<9x64xf32> to vector<1x64xf32>
    %137 = vector.shape_cast %136 : vector<1x64xf32> to vector<64xf32>
    %138 = vector.shape_cast %137 : vector<64xf32> to vector<1x64xf32>
    %139 = vector.broadcast %138 : vector<1x64xf32> to vector<8x64xf32>
    %140 = arith.mulf %135, %139 : vector<8x64xf32>
    %141 = vector.extract_strided_slice %128 {offsets = [1, 0], sizes = [1, 64], strides = [1, 1]} : vector<9x64xf32> to vector<1x64xf32>
    %142 = vector.shape_cast %141 : vector<1x64xf32> to vector<64xf32>
    %143 = vector.shape_cast %142 : vector<64xf32> to vector<1x64xf32>
    %144 = vector.broadcast %143 : vector<1x64xf32> to vector<8x64xf32>
    %145 = arith.mulf %132, %144 : vector<8x64xf32>
    %146 = arith.addf %140, %145 : vector<8x64xf32>
    %c63_i32_39 = arith.constant 63 : i32
    %147 = tpu.dynamic_rotate %132 by %c63_i32_39 dim 1 : vector<8x64xf32>, i32 -> vector<8x64xf32>
    %cst_40 = arith.constant 0.000000e+00 : f32
    %148 = vector.broadcast %cst_40 : f32 to vector<8x64xf32>
    %149 = arith.select %39, %147, %148 : vector<8x64xi1>, vector<8x64xf32>
    %150 = vector.extract_strided_slice %128 {offsets = [2, 0], sizes = [1, 64], strides = [1, 1]} : vector<9x64xf32> to vector<1x64xf32>
    %151 = vector.shape_cast %150 : vector<1x64xf32> to vector<64xf32>
    %152 = vector.shape_cast %151 : vector<64xf32> to vector<1x64xf32>
    %153 = vector.broadcast %152 : vector<1x64xf32> to vector<8x64xf32>
    %154 = arith.mulf %149, %153 : vector<8x64xf32>
    %155 = arith.addf %146, %154 : vector<8x64xf32>
    %c1_i32_41 = arith.constant 1 : i32
    %156 = tpu.dynamic_rotate %127 by %c1_i32_41 dim 1 : vector<8x64xf32>, i32 -> vector<8x64xf32>
    %cst_42 = arith.constant 0.000000e+00 : f32
    %157 = vector.broadcast %cst_42 : f32 to vector<8x64xf32>
    %158 = arith.select %37, %156, %157 : vector<8x64xi1>, vector<8x64xf32>
    %159 = vector.extract_strided_slice %128 {offsets = [3, 0], sizes = [1, 64], strides = [1, 1]} : vector<9x64xf32> to vector<1x64xf32>
    %160 = vector.shape_cast %159 : vector<1x64xf32> to vector<64xf32>
    %161 = vector.shape_cast %160 : vector<64xf32> to vector<1x64xf32>
    %162 = vector.broadcast %161 : vector<1x64xf32> to vector<8x64xf32>
    %163 = arith.mulf %158, %162 : vector<8x64xf32>
    %164 = arith.addf %155, %163 : vector<8x64xf32>
    %165 = vector.extract_strided_slice %128 {offsets = [4, 0], sizes = [1, 64], strides = [1, 1]} : vector<9x64xf32> to vector<1x64xf32>
    %166 = vector.shape_cast %165 : vector<1x64xf32> to vector<64xf32>
    %167 = vector.shape_cast %166 : vector<64xf32> to vector<1x64xf32>
    %168 = vector.broadcast %167 : vector<1x64xf32> to vector<8x64xf32>
    %169 = arith.mulf %127, %168 : vector<8x64xf32>
    %170 = arith.addf %164, %169 : vector<8x64xf32>
    %c63_i32_43 = arith.constant 63 : i32
    %171 = tpu.dynamic_rotate %127 by %c63_i32_43 dim 1 : vector<8x64xf32>, i32 -> vector<8x64xf32>
    %cst_44 = arith.constant 0.000000e+00 : f32
    %172 = vector.broadcast %cst_44 : f32 to vector<8x64xf32>
    %173 = arith.select %39, %171, %172 : vector<8x64xi1>, vector<8x64xf32>
    %174 = vector.extract_strided_slice %128 {offsets = [5, 0], sizes = [1, 64], strides = [1, 1]} : vector<9x64xf32> to vector<1x64xf32>
    %175 = vector.shape_cast %174 : vector<1x64xf32> to vector<64xf32>
    %176 = vector.shape_cast %175 : vector<64xf32> to vector<1x64xf32>
    %177 = vector.broadcast %176 : vector<1x64xf32> to vector<8x64xf32>
    %178 = arith.mulf %173, %177 : vector<8x64xf32>
    %179 = arith.addf %170, %178 : vector<8x64xf32>
    %c7_i32_45 = arith.constant 7 : i32
    %180 = tpu.dynamic_rotate %127 by %c7_i32_45 dim 0 : vector<8x64xf32>, i32 -> vector<8x64xf32>
    %cst_46 = arith.constant 0.000000e+00 : f32
    %181 = vector.broadcast %cst_46 : f32 to vector<8x64xf32>
    %182 = arith.select %35, %180, %181 : vector<8x64xi1>, vector<8x64xf32>
    %c1_i32_47 = arith.constant 1 : i32
    %183 = tpu.dynamic_rotate %182 by %c1_i32_47 dim 1 : vector<8x64xf32>, i32 -> vector<8x64xf32>
    %cst_48 = arith.constant 0.000000e+00 : f32
    %184 = vector.broadcast %cst_48 : f32 to vector<8x64xf32>
    %185 = arith.select %37, %183, %184 : vector<8x64xi1>, vector<8x64xf32>
    %186 = vector.extract_strided_slice %128 {offsets = [6, 0], sizes = [1, 64], strides = [1, 1]} : vector<9x64xf32> to vector<1x64xf32>
    %187 = vector.shape_cast %186 : vector<1x64xf32> to vector<64xf32>
    %188 = vector.shape_cast %187 : vector<64xf32> to vector<1x64xf32>
    %189 = vector.broadcast %188 : vector<1x64xf32> to vector<8x64xf32>
    %190 = arith.mulf %185, %189 : vector<8x64xf32>
    %191 = arith.addf %179, %190 : vector<8x64xf32>
    %192 = vector.extract_strided_slice %128 {offsets = [7, 0], sizes = [1, 64], strides = [1, 1]} : vector<9x64xf32> to vector<1x64xf32>
    %193 = vector.shape_cast %192 : vector<1x64xf32> to vector<64xf32>
    %194 = vector.shape_cast %193 : vector<64xf32> to vector<1x64xf32>
    %195 = vector.broadcast %194 : vector<1x64xf32> to vector<8x64xf32>
    %196 = arith.mulf %182, %195 : vector<8x64xf32>
    %197 = arith.addf %191, %196 : vector<8x64xf32>
    %c63_i32_49 = arith.constant 63 : i32
    %198 = tpu.dynamic_rotate %182 by %c63_i32_49 dim 1 : vector<8x64xf32>, i32 -> vector<8x64xf32>
    %cst_50 = arith.constant 0.000000e+00 : f32
    %199 = vector.broadcast %cst_50 : f32 to vector<8x64xf32>
    %200 = arith.select %39, %198, %199 : vector<8x64xi1>, vector<8x64xf32>
    %201 = vector.extract_strided_slice %128 {offsets = [8, 0], sizes = [1, 64], strides = [1, 1]} : vector<9x64xf32> to vector<1x64xf32>
    %202 = vector.shape_cast %201 : vector<1x64xf32> to vector<64xf32>
    %203 = vector.shape_cast %202 : vector<64xf32> to vector<1x64xf32>
    %204 = vector.broadcast %203 : vector<1x64xf32> to vector<8x64xf32>
    %205 = arith.mulf %200, %204 : vector<8x64xf32>
    %206 = arith.addf %197, %205 : vector<8x64xf32>
    %207 = vector.broadcast %129 : vector<1x64xf32> to vector<8x64xf32>
    %208 = arith.addf %206, %207 : vector<8x64xf32>
    %cst_51 = arith.constant 5.000000e-01 : f32
    %209 = vector.broadcast %cst_51 : f32 to vector<8x64xf32>
    %210 = arith.mulf %209, %208 : vector<8x64xf32>
    %211 = math.tanh %210 : vector<8x64xf32>
    %cst_52 = arith.constant 5.000000e-01 : f32
    %212 = vector.broadcast %cst_52 : f32 to vector<8x64xf32>
    %213 = arith.mulf %212, %211 : vector<8x64xf32>
    %cst_53 = arith.constant 5.000000e-01 : f32
    %214 = vector.broadcast %cst_53 : f32 to vector<8x64xf32>
    %215 = arith.addf %213, %214 : vector<8x64xf32>
    %c0_54 = arith.constant 0 : index
    %c0_55 = arith.constant 0 : index
    %216 = vector.load %arg5[%c0_54, %c0_55] : memref<8x64xf32, #tpu.memory_space<vmem>>, vector<8x64xf32>
    tpu.vector_store %arg5[%c0_54, %c0_55], %215 {strides = array<i32>} : memref<8x64xf32, #tpu.memory_space<vmem>>, vector<8x64xf32>,
    return
  }
}

</mosaic_0001>

<llo_original>
// kernel: tpu_custom_call.1
$region0: #{tpu_custom_call.1}
  #allocation0 [shape = 'u32[]', space=smem, size = 0x4, offset = 0x4, fixed_abs, tag = 'smem constant byte address 0x4 - core index']
  #allocation1 [shape = 'u32[144,128]{1,0:T(1,128)}', space=vmem, size = 0x12000, scoped, tag = 'internal scratch']
  %s0 = inlined_call_operand.hbm [shape: f32[2,2,8,64], index: 0, kind: input, shape index: {}]
  %s1 = inlined_call_operand.hbm [shape: f32[9,64], index: 1, kind: input, shape index: {}]
  %s2 = inlined_call_operand.vmem [shape: f32[1,64], index: 2, kind: input, shape index: {}]
  %s3 = inlined_call_operand.hbm [shape: f32[9,64], index: 3, kind: input, shape index: {}]
  %s4 = inlined_call_operand.vmem [shape: f32[1,64], index: 4, kind: input, shape index: {}]
  %s5 = inlined_call_operand.hbm [shape: f32[8,64], index: 5, kind: output, shape index: {}]
  %s6 = sld [smem:[#allocation0]]
  $region42: #{tpu_custom_call.1} parent=0
    _
  %s8 = ssub.s32 1, %s6
  %s9 = scalar_select 0, %s8, %s6
  $region1: #{tpu_custom_call.1} parent=0
    #allocation2 [shape = 'u8[16384]{0}', space=vmem, size = 0x4000, scoped, tag = 'input window, operand 0, single buffered']
    #allocation3 [shape = 's32[1]{0}', space=sflag, size = 0x4, scoped, tag = 'scoped memory for tpu_custom_call.1']
    #allocation4 [shape = 's32[1]{0}', space=sflag, size = 0x4, scoped, tag = 'scoped memory for tpu_custom_call.1']
    #allocation5 [shape = 'u8[8192]{0}', space=vmem, size = 0x2000, scoped, tag = 'input window, operand 1, single buffered']
    #allocation6 [shape = 's32[1]{0}', space=sflag, size = 0x4, scoped, tag = 'scoped memory for tpu_custom_call.1']
    #allocation7 [shape = 'u8[8192]{0}', space=vmem, size = 0x2000, scoped, tag = 'input window, operand 3, single buffered']
    #allocation8 [shape = 'u8[4096]{0}', space=vmem, size = 0x1000, scoped, tag = 'output window, operand 0, single buffered']
    %10 = vsyncpa [#allocation3], 0
    %11 = vsyncpa [#allocation6], 0
    %12 = vsyncpa [#allocation4], 0
    // Predicated region
    $region2: #{tpu_custom_call.1} parent=1 // pred_check
      _
    $region3: #{tpu_custom_call.1} parent=1 // pred_check_branch
      %14 = sbr.rel (0) target = $region5
    $region4: #{tpu_custom_call.1} parent=1 // pred_region
      %s16 = ssub.s32 512, 512
      %17 = vsyncadd [#allocation3], %s16
      %s18 = sshll.u32 [#allocation2], 4
      %s19 = int_to_ptr.vmem [resolvable:$true] %s18
      %24 = dma.hbm_to_vmem [thread:$0]  %s0, 512, %s19, [#allocation3], 128, 128, 8
    $region5: #{tpu_custom_call.1} parent=1 // pred_fallthru
      _
    // Predicated region
    $region6: #{tpu_custom_call.1} parent=1 // pred_check
      _
    $region7: #{tpu_custom_call.1} parent=1 // pred_check_branch
      %26 = sbr.rel (0) target = $region9
    $region8: #{tpu_custom_call.1} parent=1 // pred_region
      %s28 = ssub.s32 256, 256
      %29 = vsyncadd [#allocation6], %s28
      %s30 = sshll.u32 [#allocation5], 4
      %s31 = int_to_ptr.vmem [resolvable:$true] %s30
      %36 = dma.hbm_to_vmem [thread:$0]  %s1, 256, %s31, [#allocation6], 128, 128, 8
    $region9: #{tpu_custom_call.1} parent=1 // pred_fallthru
      _
    // Predicated region
    $region10: #{tpu_custom_call.1} parent=1 // pred_check
      _
    $region11: #{tpu_custom_call.1} parent=1 // pred_check_branch
      %38 = sbr.rel (0) target = $region13
    $region12: #{tpu_custom_call.1} parent=1 // pred_region
      _
    $region13: #{tpu_custom_call.1} parent=1 // pred_fallthru
      _
    // Predicated region
    $region14: #{tpu_custom_call.1} parent=1 // pred_check
      _
    $region15: #{tpu_custom_call.1} parent=1 // pred_check_branch
      %40 = sbr.rel (0) target = $region17
    $region16: #{tpu_custom_call.1} parent=1 // pred_region
      %s42 = ssub.s32 256, 256
      %43 = vsyncadd [#allocation6], %s42
      %s44 = sshll.u32 [#allocation7], 4
      %s45 = int_to_ptr.vmem [resolvable:$true] %s44
      %50 = dma.hbm_to_vmem [thread:$0]  %s3, 256, %s45, [#allocation6], 128, 128, 8
    $region17: #{tpu_custom_call.1} parent=1 // pred_fallthru
      _
    // Predicated region
    $region18: #{tpu_custom_call.1} parent=1 // pred_check
      _
    $region19: #{tpu_custom_call.1} parent=1 // pred_check_branch
      %52 = sbr.rel (0) target = $region21
    $region20: #{tpu_custom_call.1} parent=1 // pred_region
      _
    $region21: #{tpu_custom_call.1} parent=1 // pred_fallthru
      _
    // Predicated region
    $region22: #{tpu_custom_call.1} parent=1 // pred_check
      _
    $region23: #{tpu_custom_call.1} parent=1 // pred_check_branch
      %54 = sbr.rel (0) target = $region25
    $region24: #{tpu_custom_call.1} parent=1 // pred_region
      %55 = dma.done [#allocation3], 512
    $region25: #{tpu_custom_call.1} parent=1 // pred_fallthru
      _
    // Predicated region
    $region26: #{tpu_custom_call.1} parent=1 // pred_check
      _
    $region27: #{tpu_custom_call.1} parent=1 // pred_check_branch
      %57 = sbr.rel (0) target = $region29
    $region28: #{tpu_custom_call.1} parent=1 // pred_region
      %58 = dma.done [#allocation6], 256
    $region29: #{tpu_custom_call.1} parent=1 // pred_fallthru
      _
    // Predicated region
    $region30: #{tpu_custom_call.1} parent=1 // pred_check
      _
    $region31: #{tpu_custom_call.1} parent=1 // pred_check_branch
      %60 = sbr.rel (0) target = $region33
    $region32: #{tpu_custom_call.1} parent=1 // pred_region
      %61 = dma.done [#allocation6], 256
    $region33: #{tpu_custom_call.1} parent=1 // pred_fallthru
      _
    %v62 = vld [vmem:[#allocation2] sm:$0xff]
    %v63 = vld [vmem:[#allocation2 + $0x8] sm:$0xff]
    %v64 = vld [vmem:[#allocation2 + $0x10] sm:$0xff]
    %v65 = vld [vmem:[#allocation2 + $0x18] sm:$0xff]
    %v66 = vadd.f32 %v62, %v63
    %v67 = vadd.f32 %v66, %v64
    %v68 = vadd.f32 %v67, %v65
    %v69 = vmul.f32 %v68, 0.25
    %v70 = vlaneseq
    %v71 = vshrl.u32 %v70, 7
    %v72 = vlaneseq
    %v73 = vand.u32 %v72, 127
    %vm74 = vcmp.lt.s32.totalorder %v73, 0
    %v75 = vsub.s32 0, %v73
    %v76 = vsel %vm74, %v75, %v73
    %v77 = vshrl.u32 %v76, 3
    %v78 = vand.u32 %v76, 7
    %v79 = vsub.s32 0, %v78
    %v80 = vsel %vm74, %v79, %v78
    %vm81 = vcmp.ne.s32.totalorder %v80, 0
    %vm82 = vcmp.lt.s32.totalorder %v80, 0
    %vm83 = vmand %vm82, %vm81
    %v84 = vadd.s32 %v80, 8
    %v85 = vsel %vm83, %v84, %v80
    %vm86 = vcmp.ge.s32.totalorder %v71, 1
    %vm87 = vcmp.lt.s32.totalorder %v71, 7
    %vm88 = vcmp.ge.s32.totalorder %v85, 1
    %vm89 = vcmp.lt.s32.totalorder %v85, 7
    %v90 = vld [vmem:[#allocation5] sm:$0xff]
    %v91 = vld [vmem:[#allocation5 + $0x8] sm:$0x1]
    %v92 = vld [vmem:[%s2] sm:$0x1]
    %v93 = vrot.slane %v69, 7
    %v94 = vsel %vm86, %v93, 0.0
    %vm95 = vcmask 1048064
    %96 = vrot.lane.b32.xlu0 %v94, 64
    %v97 = vpop.permute.xlu0 %96
    %v98 = vsel %vm95, %v97, %v94
    %99 = vrot.lane.b32.xlu0 %v98, 64
    %v100 = vpop.permute.xlu0 %99
    %v101 = vsel %vm95, %v100, %v94
    %103 = vrot.lane.b32.xlu0 %v101, 65
    %v104 = vpop.permute.xlu0 %103
    %v106 = vsel %vm88, %v104, 0.0
    %v107 = vlaneseq
    %v108 = vshrl.u32 %v107, 7
    %v109 = vsub.s32 0, %v108
    %v110 = vrot.slane %v90, %v109
    %v111 = vmul.f32 %v106, %v110
    %v112 = vlaneseq
    %v113 = vshrl.u32 %v112, 7
    %v114 = vsub.s32 1, %v113
    %v115 = vrot.slane %v90, %v114
    %v116 = vmul.f32 %v94, %v115
    %v117 = vadd.f32 %v111, %v116
    %118 = vrot.lane.b32.xlu0 %v101, 127
    %v119 = vpop.permute.xlu0 %118
    %v121 = vsel %vm89, %v119, 0.0
    %v122 = vlaneseq
    %v123 = vshrl.u32 %v122, 7
    %v124 = vsub.s32 2, %v123
    %v125 = vrot.slane %v90, %v124
    %v126 = vmul.f32 %v121, %v125
    %v127 = vadd.f32 %v117, %v126
    %128 = vrot.lane.b32.xlu0 %v69, 64
    %v129 = vpop.permute.xlu0 %128
    %v130 = vsel %vm95, %v129, %v69
    %131 = vrot.lane.b32.xlu0 %v130, 64
    %v132 = vpop.permute.xlu0 %131
    %v133 = vsel %vm95, %v132, %v69
    %135 = vrot.lane.b32.xlu0 %v133, 65
    %v136 = vpop.permute.xlu0 %135
    %v138 = vsel %vm88, %v136, 0.0
    %v139 = vlaneseq
    %v140 = vshrl.u32 %v139, 7
    %v141 = vsub.s32 3, %v140
    %v142 = vrot.slane %v90, %v141
    %v143 = vmul.f32 %v138, %v142
    %v144 = vadd.f32 %v127, %v143
    %v145 = vlaneseq
    %v146 = vshrl.u32 %v145, 7
    %v147 = vsub.s32 4, %v146
    %v148 = vrot.slane %v90, %v147
    %v149 = vmul.f32 %v69, %v148
    %v150 = vadd.f32 %v144, %v149
    %151 = vrot.lane.b32.xlu0 %v133, 127
    %v152 = vpop.permute.xlu0 %151
    %v154 = vsel %vm89, %v152, 0.0
    %v155 = vlaneseq
    %v156 = vshrl.u32 %v155, 7
    %v157 = vsub.s32 5, %v156
    %v158 = vrot.slane %v90, %v157
    %v159 = vmul.f32 %v154, %v158
    %v160 = vadd.f32 %v150, %v159
    %v161 = vrot.slane %v69, 1
    %v162 = vsel %vm87, %v161, 0.0
    %163 = vrot.lane.b32.xlu0 %v162, 64
    %v164 = vpop.permute.xlu0 %163
    %v165 = vsel %vm95, %v164, %v162
    %166 = vrot.lane.b32.xlu0 %v165, 64
    %v167 = vpop.permute.xlu0 %166
    %v168 = vsel %vm95, %v167, %v162
    %170 = vrot.lane.b32.xlu0 %v168, 65
    %v171 = vpop.permute.xlu0 %170
    %v173 = vsel %vm88, %v171, 0.0
    %v174 = vlaneseq
    %v175 = vshrl.u32 %v174, 7
    %v176 = vsub.s32 6, %v175
    %v177 = vrot.slane %v90, %v176
    %v178 = vmul.f32 %v173, %v177
    %v179 = vadd.f32 %v160, %v178
    %v180 = vlaneseq
    %v181 = vshrl.u32 %v180, 7
    %v182 = vsub.s32 7, %v181
    %v183 = vrot.slane %v90, %v182
    %v184 = vmul.f32 %v162, %v183
    %v185 = vadd.f32 %v179, %v184
    %186 = vrot.lane.b32.xlu0 %v168, 127
    %v187 = vpop.permute.xlu0 %186
    %v189 = vsel %vm89, %v187, 0.0
    %v190 = vlaneseq
    %v191 = vshrl.u32 %v190, 7
    %v192 = vsub.s32 0, %v191
    %v193 = vrot.slane %v91, %v192
    %v194 = vmul.f32 %v189, %v193
    %v195 = vadd.f32 %v185, %v194
    %v197 = vlaneseq
    %v198 = vshrl.u32 %v197, 7
    %v199 = vsub.s32 0, %v198
    %v200 = vrot.slane %v92, %v199
    %v202 = vadd.f32 %v195, %v200
    %v203 = vmul.f32 %v202, 0.5
    %v204 = vtanh.pop %v203
    %v205 = vmul.f32 %v204, 0.5
    %v206 = vadd.f32 %v205, 0.5
    %v207 = vld [vmem:[#allocation7] sm:$0xff]
    %v208 = vld [vmem:[#allocation7 + $0x8] sm:$0x1]
    %v209 = vld [vmem:[%s4] sm:$0x1]
    %v210 = vrot.slane %v206, 7
    %v211 = vsel %vm86, %v210, 0.0
    %212 = vrot.lane.b32.xlu0 %v211, 64
    %v213 = vpop.permute.xlu0 %212
    %v214 = vsel %vm95, %v213, %v211
    %215 = vrot.lane.b32.xlu0 %v214, 64
    %v216 = vpop.permute.xlu0 %215
    %v217 = vsel %vm95, %v216, %v211
    %219 = vrot.lane.b32.xlu0 %v217, 65
    %v220 = vpop.permute.xlu0 %219
    %v222 = vsel %vm88, %v220, 0.0
    %v223 = vlaneseq
    %v224 = vshrl.u32 %v223, 7
    %v225 = vsub.s32 0, %v224
    %v226 = vrot.slane %v207, %v225
    %v227 = vmul.f32 %v222, %v226
    %v228 = vlaneseq
    %v229 = vshrl.u32 %v228, 7
    %v230 = vsub.s32 1, %v229
    %v231 = vrot.slane %v207, %v230
    %v232 = vmul.f32 %v211, %v231
    %v233 = vadd.f32 %v227, %v232
    %234 = vrot.lane.b32.xlu0 %v217, 127
    %v235 = vpop.permute.xlu0 %234
    %v237 = vsel %vm89, %v235, 0.0
    %v238 = vlaneseq
    %v239 = vshrl.u32 %v238, 7
    %v240 = vsub.s32 2, %v239
    %v241 = vrot.slane %v207, %v240
    %v242 = vmul.f32 %v237, %v241
    %v243 = vadd.f32 %v233, %v242
    %244 = vrot.lane.b32.xlu0 %v206, 64
    %v245 = vpop.permute.xlu0 %244
    %v246 = vsel %vm95, %v245, %v206
    %247 = vrot.lane.b32.xlu0 %v246, 64
    %v248 = vpop.permute.xlu0 %247
    %v249 = vsel %vm95, %v248, %v206
    %251 = vrot.lane.b32.xlu0 %v249, 65
    %v252 = vpop.permute.xlu0 %251
    %v254 = vsel %vm88, %v252, 0.0
    %v255 = vlaneseq
    %v256 = vshrl.u32 %v255, 7
    %v257 = vsub.s32 3, %v256
    %v258 = vrot.slane %v207, %v257
    %v259 = vmul.f32 %v254, %v258
    %v260 = vadd.f32 %v243, %v259
    %v261 = vlaneseq
    %v262 = vshrl.u32 %v261, 7
    %v263 = vsub.s32 4, %v262
    %v264 = vrot.slane %v207, %v263
    %v265 = vmul.f32 %v206, %v264
    %v266 = vadd.f32 %v260, %v265
    %267 = vrot.lane.b32.xlu0 %v249, 127
    %v268 = vpop.permute.xlu0 %267
    %v270 = vsel %vm89, %v268, 0.0
    %v271 = vlaneseq
    %v272 = vshrl.u32 %v271, 7
    %v273 = vsub.s32 5, %v272
    %v274 = vrot.slane %v207, %v273
    %v275 = vmul.f32 %v270, %v274
    %v276 = vadd.f32 %v266, %v275
    %v277 = vrot.slane %v206, 1
    %v278 = vsel %vm87, %v277, 0.0
    %279 = vrot.lane.b32.xlu0 %v278, 64
    %v280 = vpop.permute.xlu0 %279
    %v281 = vsel %vm95, %v280, %v278
    %282 = vrot.lane.b32.xlu0 %v281, 64
    %v283 = vpop.permute.xlu0 %282
    %v284 = vsel %vm95, %v283, %v278
    %286 = vrot.lane.b32.xlu0 %v284, 65
    %v287 = vpop.permute.xlu0 %286
    %v289 = vsel %vm88, %v287, 0.0
    %v290 = vlaneseq
    %v291 = vshrl.u32 %v290, 7
    %v292 = vsub.s32 6, %v291
    %v293 = vrot.slane %v207, %v292
    %v294 = vmul.f32 %v289, %v293
    %v295 = vadd.f32 %v276, %v294
    %v296 = vlaneseq
    %v297 = vshrl.u32 %v296, 7
    %v298 = vsub.s32 7, %v297
    %v299 = vrot.slane %v207, %v298
    %v300 = vmul.f32 %v278, %v299
    %v301 = vadd.f32 %v295, %v300
    %302 = vrot.lane.b32.xlu0 %v284, 127
    %v303 = vpop.permute.xlu0 %302
    %v305 = vsel %vm89, %v303, 0.0
    %v306 = vlaneseq
    %v307 = vshrl.u32 %v306, 7
    %v308 = vsub.s32 0, %v307
    %v309 = vrot.slane %v208, %v308
    %v310 = vmul.f32 %v305, %v309
    %v311 = vadd.f32 %v301, %v310
    %v313 = vlaneseq
    %v314 = vshrl.u32 %v313, 7
    %v315 = vsub.s32 0, %v314
    %v316 = vrot.slane %v209, %v315
    %v318 = vadd.f32 %v311, %v316
    %v319 = vmul.f32 %v318, 0.5
    %v320 = vtanh.pop %v319
    %v321 = vmul.f32 %v320, 0.5
    %v322 = vadd.f32 %v321, 0.5
    %vm323 = vcmask 523264
    %324 = vst.msk [vmem:[#allocation8] sm:$0xff] %vm323, %v322
    // Predicated region
    $region34: #{tpu_custom_call.1} parent=1 // pred_check
      _
    $region35: #{tpu_custom_call.1} parent=1 // pred_check_branch
      %326 = sbr.rel (0) target = $region37
    $region36: #{tpu_custom_call.1} parent=1 // pred_region
      %s328 = ssub.s32 128, 128
      %329 = vsyncadd [#allocation4], %s328
      %s331 = sshll.u32 [#allocation8], 4
      %s332 = int_to_ptr.vmem [resolvable:$true] %s331
      %334 = dma.vmem_to_hbm [thread:$0]  %s332, 128, %s5, [#allocation4]
    $region37: #{tpu_custom_call.1} parent=1 // pred_fallthru
      _
    // Predicated region
    $region38: #{tpu_custom_call.1} parent=1 // pred_check
      _
    $region39: #{tpu_custom_call.1} parent=1 // pred_check_branch
      %336 = sbr.rel (0) target = $region41
    $region40: #{tpu_custom_call.1} parent=1 // pred_region
      %337 = dma.done [#allocation4], 128
    $region41: #{tpu_custom_call.1} parent=1 // pred_fallthru
      _
    %338 = vsyncpa [#allocation3], 1
    %339 = vsyncpa [#allocation6], 1
    %340 = vsyncpa [#allocation4], 1

</llo_original>
